<compile_context>
chip_gen: v7x
topology: tpu7x:2x2x1
jax: 0.10.0
libtpu: 0.0.40
codegen_flags: <defaults>
</compile_context>

<pallas_src>
import functools

import jax
import jax.numpy as jnp
from jax.experimental import pallas as pl
from jax.experimental.pallas import tpu as pltpu


# --------------------------------------------------------------------------
# Pallas kernel
# --------------------------------------------------------------------------
def _blur_kernel(av_ref, ah_ref, x_ref, o_ref, tmp_ref, *, mat_dtype, clip_bounds):
    # av_ref : (H, H)        vertical blur band matrix (reflect folded in)
    # ah_ref : (Wp, Wp)      horizontal blur, block-diagonal over packed planes
    # x_ref  : (B, H, Wp)    B packed image planes
    # o_ref  : (B, H, Wp)
    # tmp_ref: (B, H, Wp)    VMEM scratch holding the horizontal-pass result
    B, H, Wp = x_ref.shape
    av = av_ref[...]
    ah = ah_ref[...]

    # Horizontal pass: one big MXU matmul, M = B*H, K = N = Wp (lane-dense).
    x = x_ref[...].astype(mat_dtype).reshape(B * H, Wp)
    tmp = jnp.dot(x, ah, preferred_element_type=jnp.float32)
    tmp_ref[...] = tmp.reshape(B, H, Wp).astype(mat_dtype)

    # Vertical pass: per plane (H,H)@(H,Wp), written straight to o_ref so only
    # one plane's result is ever live.
    def body(b, carry):
        out = jnp.dot(av, tmp_ref[b], preferred_element_type=jnp.float32)
        if clip_bounds is not None:  # integer outputs: round + clamp to range
            out = jnp.clip(jnp.round(out), clip_bounds[0], clip_bounds[1])
        o_ref[b] = out.astype(o_ref.dtype)
        return carry

    jax.lax.fori_loop(0, B, body, 0, unroll=True)


# --------------------------------------------------------------------------
# Wrapper-side helpers
# --------------------------------------------------------------------------
def _gaussian_kernel1d(kernel_size, sigma):
    # matches torchvision _get_gaussian_kernel1d
    half = (kernel_size - 1) * 0.5
    xs = jnp.linspace(-half, half, kernel_size, dtype=jnp.float32)
    pdf = jnp.exp(-0.5 * (xs / sigma) ** 2)
    return pdf / jnp.sum(pdf)


def _reflect_index(idx, n):
    # 'reflect' padding index folding (no edge repeat), valid for pad <= n-1
    idx = jnp.abs(idx)
    return jnp.where(idx >= n, 2 * (n - 1) - idx, idx)


def _band_matrix(n, k1d, ksize):
    """(n, n) matrix A with (A @ v)[r] = sum_t k1d[t] * v[reflect(r + t - pad)]."""
    pad = ksize // 2
    rows = jnp.arange(n)[:, None]                      # (n, 1)
    offs = jnp.arange(ksize)[None, :] - pad            # (1, K)
    src = _reflect_index(rows + offs, n)               # (n, K)
    A = jnp.zeros((n, n), jnp.float32)
    A = A.at[jnp.broadcast_to(rows, (n, ksize)), src].add(
        jnp.broadcast_to(k1d[None, :], (n, ksize)))
    return A


def _vmem_capacity_bytes():
    """Per-generation VMEM capacity; conservative 64 MiB (v7x) fallback."""
    try:
        info = pltpu.get_tpu_info()
        cap = getattr(info, "vmem_capacity_bytes", None)
        if cap:
            return int(cap)
    except Exception:
        pass
    return 64 * 1024 * 1024


def _plan_tiles(n_planes, H, Wp, in_bytes, out_bytes, mat_bytes, min_grid_steps=2):
    """Pick planes-per-step B from the real VMEM footprint and return
    (B, vmem_limit_bytes)."""
    budget = max(32 * 1024 * 1024, int(_vmem_capacity_bytes() * 0.75))
    # Av/Ah get 2 pipeline buffers each despite the constant index_map.
    fixed = 2 * mat_bytes * (H * H + Wp * Wp)
    # 2x in + 2x out (double-buffered pipeline) + tmp scratch + f32 temporaries.
    per_plane = H * Wp * (2 * in_bytes + 2 * out_bytes + mat_bytes + 4)
    b = max(1, (budget - fixed) // per_plane)
    # Blocks beyond a few MiB are past the HBM-roofline knee; also bounds unroll.
    b = min(b, max(1, (8 * 1024 * 1024) // (H * Wp * 4)), 64)
    # Keep >= min_grid_steps grid steps so pipelining / 2-TC split can happen.
    if n_planes >= min_grid_steps:
        b = min(b, max(1, n_planes // min_grid_steps))
    return int(max(1, min(b, n_planes))), int(budget)


def gaussian_blur_pallas(img, k1d, ksize):
    """Depthwise separable Gaussian blur with reflect padding.

    img: (N, C, H, W), k1d: (K,) normalized 1D Gaussian taps.
    """
    N, C, H, W = img.shape
    pad = ksize // 2
    if pad > min(H, W) - 1:
        raise ValueError("reflect padding requires kernel_size//2 <= min(H, W) - 1")

    NC = N * C
    in_dt = img.dtype
    itemsize = jnp.dtype(in_dt).itemsize

    # bf16 MXU path for integer / half inputs (full MXU rate, f32 accumulation).
    if jnp.issubdtype(in_dt, jnp.integer) or in_dt in (
            jnp.dtype(jnp.bfloat16), jnp.dtype(jnp.float16)):
        mat_dtype = jnp.bfloat16
    else:
        mat_dtype = jnp.float32
    mat_bytes = jnp.dtype(mat_dtype).itemsize

    clip_bounds = None
    if jnp.issubdtype(in_dt, jnp.integer):
        info = jnp.iinfo(in_dt)
        clip_bounds = (float(info.min), float(info.max))

    # Lane packing for narrow images: Gw planes side-by-side along the lane dim.
    Gw = 1 if W >= 128 else -(-128 // W)
    Wp = Gw * W

    # Band matrices (reflect folded in); block-diagonal Ah keeps packed planes
    # independent in the horizontal pass.
    Av = _band_matrix(H, k1d, ksize).astype(mat_dtype)                    # out = Av @ X
    Ah = jnp.kron(jnp.eye(Gw, dtype=jnp.float32),
                  _band_matrix(W, k1d, ksize)).T.astype(mat_dtype)        # out = X @ Ah

    planes = -(-NC // Gw)
    B, vmem_limit = _plan_tiles(planes, H, Wp, itemsize, itemsize, mat_bytes)
    planes_pad = -(-planes // B) * B
    NCp = planes_pad * Gw

    # Pad with zero planes (instead of shrinking B) and pack along lanes.
    x = img.reshape(NC, H, W)
    if NCp != NC:
        x = jnp.pad(x, ((0, NCp - NC), (0, 0), (0, 0)))
    x = x.reshape(planes_pad, Gw, H, W).transpose(0, 2, 1, 3).reshape(planes_pad, H, Wp)

    grid = (planes_pad // B,)
    flops = 2 * planes_pad * H * Wp * (H + Wp)
    bytes_accessed = planes_pad * H * Wp * 2 * itemsize + (H * H + Wp * Wp) * mat_bytes

    out = pl.pallas_call(
        functools.partial(_blur_kernel, mat_dtype=mat_dtype, clip_bounds=clip_bounds),
        out_shape=jax.ShapeDtypeStruct((planes_pad, H, Wp), in_dt),
        grid_spec=pltpu.PrefetchScalarGridSpec(
            num_scalar_prefetch=0,
            grid=grid,
            in_specs=[
                pl.BlockSpec((H, H), lambda n: (0, 0)),         # Av, resident in VMEM
                pl.BlockSpec((Wp, Wp), lambda n: (0, 0)),       # Ah, resident in VMEM
                pl.BlockSpec((B, H, Wp), lambda n: (n, 0, 0)),  # B packed planes / step
            ],
            out_specs=pl.BlockSpec((B, H, Wp), lambda n: (n, 0, 0)),
            scratch_shapes=[pltpu.VMEM((B, H, Wp), mat_dtype)],
        ),
        compiler_params=pltpu.CompilerParams(
            # TODO(synk): switch to pltpu.CORE_PARALLEL on v7x (2 TCs) once the
            # generation is detected; plain "parallel" is safe on 1-TC chips.
            dimension_semantics=("parallel",),
            vmem_limit_bytes=vmem_limit,
        ),
        cost_estimate=pl.CostEstimate(
            flops=int(flops), transcendentals=0, bytes_accessed=int(bytes_accessed)),
    )(Av, Ah, x)

    out = (out.reshape(planes_pad, H, Gw, W)
              .transpose(0, 2, 1, 3)
              .reshape(NCp, H, W)[:NC]
              .reshape(N, C, H, W))
    return out


def random_gaussian_blur(img, key, kernel_size=5, sigma=(0.2, 4.0), p=0.5):
    """JAX equivalent of RandomGaussianBlur.forward (whole-batch coin, like the module)."""
    k_sigma, k_coin = jax.random.split(key)
    sig = jax.random.uniform(k_sigma, (), jnp.float32,
                             minval=sigma[0], maxval=sigma[1])
    coin = jax.random.uniform(k_coin, (), jnp.float32)
    k1d = _gaussian_kernel1d(kernel_size, sig)
    # Skip the blur entirely (kernel + all prep) when the coin flip fails.
    return jax.lax.cond(
        coin < p,
        lambda x: gaussian_blur_pallas(x, k1d, kernel_size),
        lambda x: x,
        img,
    )


# --------------------------------------------------------------------------
# Pure-JAX reference (direct K*K stencil on a reflect-padded copy)
# --------------------------------------------------------------------------
def _reference_blur(img, k1d, ksize):
    pad = ksize // 2
    N, C, H, W = img.shape
    xp = jnp.pad(img.astype(jnp.float32),
                 ((0, 0), (0, 0), (pad, pad), (pad, pad)), mode="reflect")
    k2d = jnp.outer(k1d, k1d)
    out = jnp.zeros((N, C, H, W), jnp.float32)
    for i in range(ksize):
        for j in range(ksize):
            out = out + k2d[i, j] * xp[:, :, i:i + H, j:j + W]
    return out.astype(img.dtype)


if __name__ == "__main__":
    key = jax.random.PRNGKey(0)
    k_img, k_aug, k_sig = jax.random.split(key, 3)

    N, C, H, W = 2, 4, 16, 16
    img = jax.random.normal(k_img, (N, C, H, W), dtype=jnp.float32)

    # 1) Run the Pallas blur kernel directly and check it against the reference.
    ksize = 5
    sig = jax.random.uniform(k_sig, (), jnp.float32, minval=0.2, maxval=4.0)
    k1d = _gaussian_kernel1d(ksize, sig)
    blurred = jax.block_until_ready(gaussian_blur_pallas(img, k1d, ksize))
    ref = jax.block_until_ready(_reference_blur(img, k1d, ksize))
    assert blurred.shape == img.shape and blurred.dtype == img.dtype
    max_err = float(jnp.max(jnp.abs(blurred - ref)))
    assert max_err < 5e-2, f"blur mismatch, max abs err = {max_err}"

    # 2) Run the full module-equivalent forward (random sigma + probability gate).
    out = jax.block_until_ready(
        random_gaussian_blur(img, k_aug, kernel_size=5, sigma=(0.2, 4.0), p=0.5))
    assert out.shape == img.shape and out.dtype == img.dtype

    print("KERNEL_OK")
</pallas_src>

<mosaic_0001>
module attributes {stable_mosaic.version = 11 : i64} {
  func.func @_blur_kernel(%arg0: i32, %arg1: memref<16x16xf32, #tpu.memory_space<vmem>>, %arg2: memref<128x128xf32, #tpu.memory_space<vmem>>, %arg3: memref<1x16x128xf32, #tpu.memory_space<vmem>>, %arg4: memref<1x16x128xf32, #tpu.memory_space<vmem>>, %arg5: memref<1x16x128xf32, #tpu.memory_space<vmem>>) attributes {dimension_semantics = [#tpu.dimension_semantics<parallel>], iteration_bounds = array<i64: 1>, scalar_prefetch = 0 : i64, scratch_operands = 1 : i64, tpu.core_type = #tpu.core_type<tc>, window_params = [{pipeline_mode = #tpu.pipeline_mode<synchronous>, transform_indices = @transform_0, window_bounds = array<i64: 16, 16>}, {pipeline_mode = #tpu.pipeline_mode<synchronous>, transform_indices = @transform_1, window_bounds = array<i64: 128, 128>}, {transform_indices = @transform_2, window_bounds = array<i64: 1, 16, 128>}, {transform_indices = @transform_3, window_bounds = array<i64: 1, 16, 128>}]} {
    %c0 = arith.constant 0 : index
    %c0_0 = arith.constant 0 : index
    %0 = vector.load %arg1[%c0, %c0_0] : memref<16x16xf32, #tpu.memory_space<vmem>>, vector<16x16xf32>
    %c0_1 = arith.constant 0 : index
    %c0_2 = arith.constant 0 : index
    %1 = vector.load %arg2[%c0_1, %c0_2] : memref<128x128xf32, #tpu.memory_space<vmem>>, vector<128x128xf32>
    %c0_3 = arith.constant 0 : index
    %c0_4 = arith.constant 0 : index
    %c0_5 = arith.constant 0 : index
    %2 = vector.load %arg3[%c0_3, %c0_4, %c0_5] : memref<1x16x128xf32, #tpu.memory_space<vmem>>, vector<1x16x128xf32>
    %3 = vector.shape_cast %2 : vector<1x16x128xf32> to vector<16x128xf32>
    %cst = arith.constant dense<0.000000e+00> : vector<16x128xf32>
    %4 = tpu.matmul %3, %1, %cst {dimension_numbers = #tpu.dot_dimension_numbers<[1], [0], [0], [1], [0, 0, 1, 1], [], []>} : vector<16x128xf32>, vector<128x128xf32>, vector<16x128xf32> -> vector<16x128xf32>
    %5 = vector.shape_cast %4 : vector<16x128xf32> to vector<1x16x128xf32>
    %c0_6 = arith.constant 0 : index
    %c0_7 = arith.constant 0 : index
    %c0_8 = arith.constant 0 : index
    %6 = vector.load %arg5[%c0_6, %c0_7, %c0_8] : memref<1x16x128xf32, #tpu.memory_space<vmem>>, vector<1x16x128xf32>
    tpu.vector_store %arg5[%c0_6, %c0_7, %c0_8], %5 {strides = array<i32>} : memref<1x16x128xf32, #tpu.memory_space<vmem>>, vector<1x16x128xf32>,
    %c0_i32 = arith.constant 0 : i32
    %7 = arith.index_cast %c0_i32 : i32 to index
    %c0_9 = arith.constant 0 : index
    %c0_10 = arith.constant 0 : index
    %8 = vector.load %arg5[%7, %c0_9, %c0_10] : memref<1x16x128xf32, #tpu.memory_space<vmem>>, vector<1x16x128xf32>
    %9 = vector.shape_cast %8 : vector<1x16x128xf32> to vector<16x128xf32>
    %cst_11 = arith.constant dense<0.000000e+00> : vector<16x128xf32>
    %10 = tpu.matmul %0, %9, %cst_11 {dimension_numbers = #tpu.dot_dimension_numbers<[1], [0], [0], [1], [0, 0, 1, 1], [], []>} : vector<16x16xf32>, vector<16x128xf32>, vector<16x128xf32> -> vector<16x128xf32>
    %11 = arith.index_cast %c0_i32 : i32 to index
    %c0_12 = arith.constant 0 : index
    %c0_13 = arith.constant 0 : index
    %12 = vector.load %arg4[%11, %c0_12, %c0_13] : memref<1x16x128xf32, #tpu.memory_space<vmem>>, vector<1x16x128xf32>
    %13 = vector.shape_cast %12 : vector<1x16x128xf32> to vector<16x128xf32>
    %14 = vector.shape_cast %10 : vector<16x128xf32> to vector<1x16x128xf32>
    tpu.vector_store %arg4[%11, %c0_12, %c0_13], %14 {strides = array<i32>} : memref<1x16x128xf32, #tpu.memory_space<vmem>>, vector<1x16x128xf32>,
    %c1_i32 = arith.constant 1 : i32
    return
  }
  func.func @transform_0(%arg0: i32) -> (i32, i32) {
    %c0_i32 = arith.constant 0 : i32
    %c0_i32_0 = arith.constant 0 : i32
    %c0_i32_1 = arith.constant 0 : i32
    return %c0_i32, %c0_i32_0 : i32, i32
  }
  func.func @transform_1(%arg0: i32) -> (i32, i32) {
    %c0_i32 = arith.constant 0 : i32
    %c0_i32_0 = arith.constant 0 : i32
    %c0_i32_1 = arith.constant 0 : i32
    return %c0_i32, %c0_i32_0 : i32, i32
  }
  func.func @transform_2(%arg0: i32) -> (i32, i32, i32) {
    %c0_i32 = arith.constant 0 : i32
    %c0_i32_0 = arith.constant 0 : i32
    %c0_i32_1 = arith.constant 0 : i32
    return %arg0, %c0_i32, %c0_i32_0 : i32, i32, i32
  }
  func.func @transform_3(%arg0: i32) -> (i32, i32, i32) {
    %c0_i32 = arith.constant 0 : i32
    %c0_i32_0 = arith.constant 0 : i32
    %c0_i32_1 = arith.constant 0 : i32
    return %arg0, %c0_i32, %c0_i32_0 : i32, i32, i32
  }
}

</mosaic_0001>

<llo_original>
// kernel: tpu_custom_call.1
$region0: #{tpu_custom_call.1}
  #allocation0 [shape = 'u32[]', space=smem, size = 0x4, offset = 0x4, fixed_abs, tag = 'smem constant byte address 0x4 - core index']
  #allocation1 [shape = 'u32[144,128]{1,0:T(1,128)}', space=vmem, size = 0x12000, scoped, tag = 'internal scratch']
  #allocation2 [shape = 'f32[1,16,128]{2,1,0:T(8,128)}', space=vmem, size = 0x2000, scoped, tag = 'scratch operand']
  %s0 = inlined_call_operand.hbm [shape: f32[16,16], index: 0, kind: input, shape index: {}]
  %s1 = inlined_call_operand.hbm [shape: f32[128,128], index: 1, kind: input, shape index: {}]
  %s2 = inlined_call_operand.hbm [shape: f32[1,16,128], index: 2, kind: input, shape index: {}]
  %s3 = inlined_call_operand.hbm [shape: f32[1,16,128], index: 3, kind: output, shape index: {}]
  %s4 = sld [smem:[#allocation0]]
  $region34: #{tpu_custom_call.1} parent=0
    _
  %s6 = ssub.s32 1, %s4
  %s7 = scalar_select 0, %s6, %s4
  $region1: #{tpu_custom_call.1} parent=0
    #allocation3 [shape = 'u8[8192]{0}', space=vmem, size = 0x2000, scoped, tag = 'input window, operand 0, single buffered']
    #allocation4 [shape = 's32[1]{0}', space=sflag, size = 0x4, scoped, tag = 'scoped memory for tpu_custom_call.1']
    #allocation5 [shape = 's32[1]{0}', space=sflag, size = 0x4, scoped, tag = 'scoped memory for tpu_custom_call.1']
    #allocation6 [shape = 'u8[65536]{0}', space=vmem, size = 0x10000, scoped, tag = 'input window, operand 1, single buffered']
    #allocation7 [shape = 's32[1]{0}', space=sflag, size = 0x4, scoped, tag = 'scoped memory for tpu_custom_call.1']
    #allocation8 [shape = 'u8[8192]{0}', space=vmem, size = 0x2000, scoped, tag = 'input window, operand 2, single buffered']
    #allocation9 [shape = 'u8[8192]{0}', space=vmem, size = 0x2000, scoped, tag = 'output window, operand 0, single buffered']
    %8 = vsyncpa [#allocation4], 0
    %9 = vsyncpa [#allocation7], 0
    %10 = vsyncpa [#allocation5], 0
    // Predicated region
    $region2: #{tpu_custom_call.1} parent=1 // pred_check
      _
    $region3: #{tpu_custom_call.1} parent=1 // pred_check_branch
      %12 = sbr.rel (0) target = $region5
    $region4: #{tpu_custom_call.1} parent=1 // pred_region
      %s14 = ssub.s32 256, 256
      %15 = vsyncadd [#allocation4], %s14
      %s16 = sshll.u32 [#allocation3], 4
      %s17 = int_to_ptr.vmem [resolvable:$true] %s16
      %22 = dma.hbm_to_vmem [thread:$0]  %s0, 256, %s17, [#allocation4], 128, 128, 8
    $region5: #{tpu_custom_call.1} parent=1 // pred_fallthru
      _
    // Predicated region
    $region6: #{tpu_custom_call.1} parent=1 // pred_check
      _
    $region7: #{tpu_custom_call.1} parent=1 // pred_check_branch
      %24 = sbr.rel (0) target = $region9
    $region8: #{tpu_custom_call.1} parent=1 // pred_region
      %s26 = ssub.s32 2048, 2048
      %27 = vsyncadd [#allocation7], %s26
      %s28 = sshll.u32 [#allocation6], 4
      %s29 = int_to_ptr.vmem [resolvable:$true] %s28
      %34 = dma.hbm_to_vmem [thread:$0]  %s1, 2048, %s29, [#allocation7], 128, 128, 8
    $region9: #{tpu_custom_call.1} parent=1 // pred_fallthru
      _
    // Predicated region
    $region10: #{tpu_custom_call.1} parent=1 // pred_check
      _
    $region11: #{tpu_custom_call.1} parent=1 // pred_check_branch
      %36 = sbr.rel (0) target = $region13
    $region12: #{tpu_custom_call.1} parent=1 // pred_region
      %s38 = ssub.s32 256, 256
      %39 = vsyncadd [#allocation7], %s38
      %s40 = sshll.u32 [#allocation8], 4
      %s41 = int_to_ptr.vmem [resolvable:$true] %s40
      %46 = dma.hbm_to_vmem [thread:$0]  %s2, 256, %s41, [#allocation7], 128, 128, 8
    $region13: #{tpu_custom_call.1} parent=1 // pred_fallthru
      _
    // Predicated region
    $region14: #{tpu_custom_call.1} parent=1 // pred_check
      _
    $region15: #{tpu_custom_call.1} parent=1 // pred_check_branch
      %48 = sbr.rel (0) target = $region17
    $region16: #{tpu_custom_call.1} parent=1 // pred_region
      %49 = dma.done [#allocation4], 256
    $region17: #{tpu_custom_call.1} parent=1 // pred_fallthru
      _
    // Predicated region
    $region18: #{tpu_custom_call.1} parent=1 // pred_check
      _
    $region19: #{tpu_custom_call.1} parent=1 // pred_check_branch
      %51 = sbr.rel (0) target = $region21
    $region20: #{tpu_custom_call.1} parent=1 // pred_region
      %52 = dma.done [#allocation7], 2048
    $region21: #{tpu_custom_call.1} parent=1 // pred_fallthru
      _
    // Predicated region
    $region22: #{tpu_custom_call.1} parent=1 // pred_check
      _
    $region23: #{tpu_custom_call.1} parent=1 // pred_check_branch
      %54 = sbr.rel (0) target = $region25
    $region24: #{tpu_custom_call.1} parent=1 // pred_region
      %55 = dma.done [#allocation7], 256
    $region25: #{tpu_custom_call.1} parent=1 // pred_fallthru
      _
    %v56 = vld [vmem:[#allocation3] sm:$0xff]
    %v57 = vld [vmem:[#allocation3 + $0x8] sm:$0xff]
    %v58 = vld [vmem:[#allocation6] sm:$0xff]
    %v59 = vld [vmem:[#allocation6 + $0x8] sm:$0xff]
    %v60 = vld [vmem:[#allocation6 + $0x10] sm:$0xff]
    %v61 = vld [vmem:[#allocation6 + $0x18] sm:$0xff]
    %v62 = vld [vmem:[#allocation6 + $0x20] sm:$0xff]
    %v63 = vld [vmem:[#allocation6 + $0x28] sm:$0xff]
    %v64 = vld [vmem:[#allocation6 + $0x30] sm:$0xff]
    %v65 = vld [vmem:[#allocation6 + $0x38] sm:$0xff]
    %v66 = vld [vmem:[#allocation6 + $0x40] sm:$0xff]
    %v67 = vld [vmem:[#allocation6 + $0x48] sm:$0xff]
    %v68 = vld [vmem:[#allocation6 + $0x50] sm:$0xff]
    %v69 = vld [vmem:[#allocation6 + $0x58] sm:$0xff]
    %v70 = vld [vmem:[#allocation6 + $0x60] sm:$0xff]
    %v71 = vld [vmem:[#allocation6 + $0x68] sm:$0xff]
    %v72 = vld [vmem:[#allocation6 + $0x70] sm:$0xff]
    %v73 = vld [vmem:[#allocation6 + $0x78] sm:$0xff]
    %v74 = vld [vmem:[#allocation8] sm:$0xff]
    %v75 = vld [vmem:[#allocation8 + $0x8] sm:$0xff]
    %76 = vmatprep.subr.mxu0 0.0
    %77 = vmatpush1.msra.mxu0 %v58
    %78 = vmatprep.subr.mxu0 0.0
    %79 = vmatpush1.msra.mxu0 %v59
    %80 = vmatprep.subr.mxu0 0.0
    %81 = vmatpush1.msra.mxu0 %v60
    %82 = vmatprep.subr.mxu0 0.0
    %83 = vmatpush1.msra.mxu0 %v61
    %84 = vmatprep.subr.mxu0 0.0
    %85 = vmatpush1.msra.mxu0 %v62
    %86 = vmatprep.subr.mxu0 0.0
    %87 = vmatpush1.msra.mxu0 %v63
    %88 = vmatprep.subr.mxu0 0.0
    %89 = vmatpush1.msra.mxu0 %v64
    %90 = vmatprep.subr.mxu0 0.0
    %91 = vmatpush1.msra.mxu0 %v65
    %92 = vmatprep.subr.mxu0 0.0
    %93 = vmatpush1.msra.mxu0 %v66
    %94 = vmatprep.subr.mxu0 0.0
    %95 = vmatpush1.msra.mxu0 %v67
    %96 = vmatprep.subr.mxu0 0.0
    %97 = vmatpush1.msra.mxu0 %v68
    %98 = vmatprep.subr.mxu0 0.0
    %99 = vmatpush1.msra.mxu0 %v69
    %100 = vmatprep.subr.mxu0 0.0
    %101 = vmatpush1.msra.mxu0 %v70
    %102 = vmatprep.subr.mxu0 0.0
    %103 = vmatpush1.msra.mxu0 %v71
    %104 = vmatprep.subr.mxu0 0.0
    %105 = vmatpush1.msra.mxu0 %v72
    %106 = vmatprep.subr.mxu0 0.0
    %107 = vmatpush1.msra.mxu0 %v73
    %108 = vmatprep.subr.mxu0 0.0
    %109 = vmatpush1.msra.mxu0 0.0
    %110 = vmatprep.subr.mxu0 0.0
    %111 = vmatpush1.msra.mxu0 0.0
    %112 = vmatprep.subr.mxu0 0.0
    %113 = vmatpush1.msra.mxu0 0.0
    %114 = vmatprep.subr.mxu0 0.0
    %115 = vmatpush1.msra.mxu0 0.0
    %116 = vmatprep.subr.mxu0 0.0
    %117 = vmatpush1.msra.mxu0 0.0
    %118 = vmatprep.subr.mxu0 0.0
    %119 = vmatpush1.msra.mxu0 0.0
    %120 = vmatprep.subr.mxu0 0.0
    %121 = vmatpush1.msra.mxu0 0.0
    %122 = vmatprep.subr.mxu0 0.0
    %123 = vmatpush1.msra.mxu0 0.0
    %124 = vmatprep.subr.mxu0 0.0
    %125 = vmatpush1.msra.mxu0 0.0
    %126 = vmatprep.subr.mxu0 0.0
    %127 = vmatpush1.msra.mxu0 0.0
    %128 = vmatprep.subr.mxu0 0.0
    %129 = vmatpush1.msra.mxu0 0.0
    %130 = vmatprep.subr.mxu0 0.0
    %131 = vmatpush1.msra.mxu0 0.0
    %132 = vmatprep.subr.mxu0 0.0
    %133 = vmatpush1.msra.mxu0 0.0
    %134 = vmatprep.subr.mxu0 0.0
    %135 = vmatpush1.msra.mxu0 0.0
    %136 = vmatprep.subr.mxu0 0.0
    %137 = vmatpush1.msra.mxu0 0.0
    %138 = vmatprep.subr.mxu0 0.0
    %139 = vmatpush1.msra.mxu0 0.0
    %140 = vmatprep.mubr.f32.mxu0 0.0
    %141 = vmatmul.mubr.f32.gmra.mrb[0].mxu0 %v74
    %v142 = vpop.f32.mrb[0].mxu0
    %v143 = vadd.f32 0.0, %v142
    %v144 = vpop.f32.mrb[0].mxu0
    %145 = vmatprep.mubr.f32.mxu0 0.0
    %146 = vmatmul.mubr.f32.gmra.mrb[0].mxu0 %v75
    %v147 = vpop.f32.mrb[0].mxu0
    %v148 = vadd.f32 0.0, %v147
    %v149 = vpop.f32.mrb[0].mxu0
    %150 = vdwg.mxu0
    %151 = vst [vmem:[#allocation2] sm:$0xff] %v143
    %152 = vst [vmem:[#allocation2 + $0x8] sm:$0xff] %v148
    %v153 = vld [vmem:[#allocation2] sm:$0xff]
    %v154 = vld [vmem:[#allocation2 + $0x8] sm:$0xff]
    %vm155 = vcmask 130048
    %v157 = vsel %vm155, %v56, 0
    %v160 = vsel %vm155, %v57, 0
    %162 = vmatprep.subr.mxu0 0.0
    %163 = vmatpush1.msra.mxu0 %v153
    %164 = vmatprep.subr.mxu0 0.0
    %165 = vmatpush1.msra.mxu0 %v154
    %166 = vmatprep.subr.mxu0 0.0
    %167 = vmatpush1.msra.mxu0 0.0
    %168 = vmatprep.subr.mxu0 0.0
    %169 = vmatpush1.msra.mxu0 0.0
    %170 = vmatprep.subr.mxu0 0.0
    %171 = vmatpush1.msra.mxu0 0.0
    %172 = vmatprep.subr.mxu0 0.0
    %173 = vmatpush1.msra.mxu0 0.0
    %174 = vmatprep.subr.mxu0 0.0
    %175 = vmatpush1.msra.mxu0 0.0
    %176 = vmatprep.subr.mxu0 0.0
    %177 = vmatpush1.msra.mxu0 0.0
    %178 = vmatprep.subr.mxu0 0.0
    %179 = vmatpush1.msra.mxu0 0.0
    %180 = vmatprep.subr.mxu0 0.0
    %181 = vmatpush1.msra.mxu0 0.0
    %182 = vmatprep.subr.mxu0 0.0
    %183 = vmatpush1.msra.mxu0 0.0
    %184 = vmatprep.subr.mxu0 0.0
    %185 = vmatpush1.msra.mxu0 0.0
    %186 = vmatprep.subr.mxu0 0.0
    %187 = vmatpush1.msra.mxu0 0.0
    %188 = vmatprep.subr.mxu0 0.0
    %189 = vmatpush1.msra.mxu0 0.0
    %190 = vmatprep.subr.mxu0 0.0
    %191 = vmatpush1.msra.mxu0 0.0
    %192 = vmatprep.subr.mxu0 0.0
    %193 = vmatpush1.msra.mxu0 0.0
    %194 = vmatprep.subr.mxu0 0.0
    %195 = vmatpush1.msra.mxu0 0.0
    %196 = vmatprep.subr.mxu0 0.0
    %197 = vmatpush1.msra.mxu0 0.0
    %198 = vmatprep.subr.mxu0 0.0
    %199 = vmatpush1.msra.mxu0 0.0
    %200 = vmatprep.subr.mxu0 0.0
    %201 = vmatpush1.msra.mxu0 0.0
    %202 = vmatprep.subr.mxu0 0.0
    %203 = vmatpush1.msra.mxu0 0.0
    %204 = vmatprep.subr.mxu0 0.0
    %205 = vmatpush1.msra.mxu0 0.0
    %206 = vmatprep.subr.mxu0 0.0
    %207 = vmatpush1.msra.mxu0 0.0
    %208 = vmatprep.subr.mxu0 0.0
    %209 = vmatpush1.msra.mxu0 0.0
    %210 = vmatprep.subr.mxu0 0.0
    %211 = vmatpush1.msra.mxu0 0.0
    %212 = vmatprep.subr.mxu0 0.0
    %213 = vmatpush1.msra.mxu0 0.0
    %214 = vmatprep.subr.mxu0 0.0
    %215 = vmatpush1.msra.mxu0 0.0
    %216 = vmatprep.subr.mxu0 0.0
    %217 = vmatpush1.msra.mxu0 0.0
    %218 = vmatprep.subr.mxu0 0.0
    %219 = vmatpush1.msra.mxu0 0.0
    %220 = vmatprep.subr.mxu0 0.0
    %221 = vmatpush1.msra.mxu0 0.0
    %222 = vmatprep.subr.mxu0 0.0
    %223 = vmatpush1.msra.mxu0 0.0
    %224 = vmatprep.subr.mxu0 0.0
    %225 = vmatpush1.msra.mxu0 0.0
    %226 = vmatprep.mubr.f32.mxu0 0.0
    %227 = vmatmul.mubr.f32.gmra.mrb[0].mxu0 %v157
    %v228 = vpop.f32.mrb[0].mxu0
    %v229 = vadd.f32 0.0, %v228
    %v230 = vpop.f32.mrb[0].mxu0
    %231 = vmatprep.mubr.f32.mxu0 0.0
    %232 = vmatmul.mubr.f32.gmra.mrb[0].mxu0 %v160
    %v233 = vpop.f32.mrb[0].mxu0
    %v234 = vadd.f32 0.0, %v233
    %v235 = vpop.f32.mrb[0].mxu0
    %236 = vdwg.mxu0
    %237 = vst [vmem:[#allocation9] sm:$0xff] %v229
    %238 = vst [vmem:[#allocation9 + $0x8] sm:$0xff] %v234
    // Predicated region
    $region26: #{tpu_custom_call.1} parent=1 // pred_check
      _
    $region27: #{tpu_custom_call.1} parent=1 // pred_check_branch
      %240 = sbr.rel (0) target = $region29
    $region28: #{tpu_custom_call.1} parent=1 // pred_region
      %s242 = ssub.s32 256, 256
      %243 = vsyncadd [#allocation5], %s242
      %s244 = sshll.u32 [#allocation9], 4
      %s245 = int_to_ptr.vmem [resolvable:$true] %s244
      %250 = dma.vmem_to_hbm [thread:$0]  %s245, 256, %s3, [#allocation5], 128, 128, 8
    $region29: #{tpu_custom_call.1} parent=1 // pred_fallthru
      _
    // Predicated region
    $region30: #{tpu_custom_call.1} parent=1 // pred_check
      _
    $region31: #{tpu_custom_call.1} parent=1 // pred_check_branch
      %252 = sbr.rel (0) target = $region33
    $region32: #{tpu_custom_call.1} parent=1 // pred_region
      %253 = dma.done [#allocation5], 256
    $region33: #{tpu_custom_call.1} parent=1 // pred_fallthru
      _
    %254 = vsyncpa [#allocation4], 1
    %255 = vsyncpa [#allocation7], 1
    %256 = vsyncpa [#allocation5], 1

</llo_original>
